<compile_context>
chip_gen: v7x
topology: tpu7x:2x2x1
jax: 0.10.0
libtpu: 0.0.40
codegen_flags: <defaults>
</compile_context>

<pallas_src>
import functools

import jax
import jax.numpy as jnp
from jax.experimental import pallas as pl
from jax.experimental.pallas import tpu as pltpu


# ---------------------------------------------------------------------------
# Small static helpers (all run at trace time).
# ---------------------------------------------------------------------------
def _largest_divisor_leq(n, cap):
    """Largest divisor of n that is <= cap (always >= 1)."""
    cap = max(1, min(cap, n))
    for d in range(cap, 0, -1):
        if n % d == 0:
            return d
    return 1


def _pick_lane_fold(n, c, cap_lanes=512):
    """Largest f such that N % f == 0, (f*C) % 128 == 0 and f*C <= cap_lanes."""
    if c % 128 == 0:
        return 1
    best = 1
    f = 1
    while f * c <= cap_lanes:
        if (f * c) % 128 == 0 and n % f == 0:
            best = f
        f += 1
    return best


def _vmem_budgets(block_budget_bytes):
    """Generation-aware per-block budgets (bytes) + scoped VMEM limit."""
    vmem_phys = 128 * 1024 * 1024
    try:
        info = pltpu.get_tpu_info()
        vmem_phys = int(getattr(info, "vmem_capacity_bytes", vmem_phys) or vmem_phys)
    except Exception:
        pass
    small_vmem = vmem_phys <= 64 * 1024 * 1024            # v7x (64 MiB physical / TC)
    vmem_limit = 32 * 1024 * 1024                          # safe on v5e/v6e/v7x
    fused_budget = 6 * 1024 * 1024                         # 4x slab (dbl-buf in+out) < limit
    apply_budget = (3 if small_vmem else 4) * 1024 * 1024  # 4x block (dbl-buf in+out)
    reduce_budget = (6 if small_vmem else 8) * 1024 * 1024  # only ~2x block lives in VMEM
    if block_budget_bytes is not None:                     # test / tuning override
        apply_budget = reduce_budget = int(block_budget_bytes)
    return vmem_limit, fused_budget, apply_budget, reduce_budget


def _gate_from_mean(mean, wr, br, we, be):
    """mean: (bt, C) f32 -> gate (bt, C) f32.  Tiny FCs, batched over bt rows."""
    h = jnp.dot(mean, wr, preferred_element_type=jnp.float32) + br
    h = h * jax.nn.sigmoid(h)                              # Swish
    s = jnp.dot(h, we, preferred_element_type=jnp.float32) + be
    return jax.nn.sigmoid(s)


def _fold_lanes_sum(acc, lane_fold):
    """(bt, CL) lane-packed partial sums -> (bt, C) per-channel sums."""
    cl = acc.shape[-1]
    c = cl // lane_fold
    summed = acc[:, 0:c]
    for f in range(1, lane_fold):
        summed = summed + acc[:, f * c:(f + 1) * c]
    return summed


# ---------------------------------------------------------------------------
# Fused single-pass kernel: mean + FCs + gated multiply in one body.
# Grid: (B // b_tile,). Block: (b_tile, Nf, CL)  -> 1 read + 1 write of points.
# ---------------------------------------------------------------------------
def _se_fused_kernel(pts_ref, wr_ref, br_ref, we_ref, be_ref, out_ref, *,
                     n_total, lane_fold, res):
    pts = pts_ref[...]                                     # (bt, Nf, CL) native dtype
    acc = jnp.sum(pts, axis=1, dtype=jnp.float32)          # (bt, CL) f32
    mean = _fold_lanes_sum(acc, lane_fold) * (1.0 / n_total)
    g = _gate_from_mean(mean, wr_ref[...], br_ref[...], we_ref[...], be_ref[...])
    if lane_fold > 1:
        g = jnp.tile(g, (1, lane_fold))                    # lane-dense (bt, CL)
    g = g.astype(pts.dtype)[:, None, :]
    if res:
        out_ref[...] = pts * g + pts                       # no (1+g) quantization
    else:
        out_ref[...] = pts * g


# ---------------------------------------------------------------------------
# Two-pass fallback.
# Pass 1: reduce N-tiles into a lane-tiled gate [B, 1, CL] (points dtype).
# ---------------------------------------------------------------------------
def _se_reduce_kernel(pts_ref, wr_ref, br_ref, we_ref, be_ref, gate_ref, acc_ref,
                      *, n_total, lane_fold, nf_valid, n_tile, needs_mask):
    nj = pl.program_id(1)

    @pl.when(nj == 0)
    def _():
        acc_ref[...] = jnp.zeros_like(acc_ref)

    pts = pts_ref[...]                                     # (bt, n_tile, CL)
    if needs_mask:
        # cdiv grid: the last N-tile extends past Nf -> zero the garbage rows.
        row = jax.lax.broadcasted_iota(jnp.int32, pts.shape, 1)
        valid = (nj * n_tile + row) < nf_valid
        pts = jnp.where(valid, pts, jnp.zeros((), pts.dtype))
    acc_ref[...] += jnp.sum(pts, axis=1, dtype=jnp.float32)

    @pl.when(nj == pl.num_programs(1) - 1)
    def _():
        mean = _fold_lanes_sum(acc_ref[...], lane_fold) * (1.0 / n_total)
        g = _gate_from_mean(mean, wr_ref[...], br_ref[...], we_ref[...], be_ref[...])
        if lane_fold > 1:
            g = jnp.tile(g, (1, lane_fold))                # pre-tiled, lane-dense
        # Pre-cast to the points dtype: pass 2 becomes pure streaming.
        gate_ref[...] = g.astype(gate_ref.dtype)[:, None, :]


# Pass 2: apply the lane-tiled gate over all points (one vmul / vreg).
def _se_apply_kernel(pts_ref, gate_ref, out_ref, *, res):
    pts = pts_ref[...]                                     # (bt, n_tile, CL)
    g = gate_ref[...]                                      # (bt, 1, CL) pts dtype
    if res:
        out_ref[...] = pts * g + pts
    else:
        out_ref[...] = pts * g


# ---------------------------------------------------------------------------
# Wrapper.
# ---------------------------------------------------------------------------
def senet_forward(xyz, points, w_reduce, b_reduce, w_expand, b_expand, *,
                  res=False, force_two_pass=False, block_budget_bytes=None):
    """points: [B, N, C]; returns (xyz, gated points [B, N, C])."""
    B, N, C = points.shape
    mid = w_reduce.shape[1]
    assert w_expand.shape[1] == C, "gate broadcast / residual needs out_channel == in_channel"
    assert w_reduce.shape[0] == C

    # Lane-densify: fold groups of consecutive point rows into the lane axis so
    # the last dim is a dense multiple of 128 (up to 512 lanes).
    lane_fold = _pick_lane_fold(N, C)
    CL = C * lane_fold
    Nf = N // lane_fold
    pts_f = points.reshape(B, Nf, CL)
    itemsize = jnp.dtype(points.dtype).itemsize

    vmem_limit, fused_budget, apply_budget, reduce_budget = _vmem_budgets(block_budget_bytes)

    def _cp(sem):
        return pltpu.CompilerParams(dimension_semantics=sem,
                                    vmem_limit_bytes=vmem_limit)

    weight_specs = [
        pl.BlockSpec((C, mid), lambda *a: (0, 0)),         # W_reduce^T
        pl.BlockSpec((1, mid), lambda *a: (0, 0)),         # b_reduce
        pl.BlockSpec((mid, C), lambda *a: (0, 0)),         # W_expand^T
        pl.BlockSpec((1, C), lambda *a: (0, 0)),           # b_expand
    ]

    slab_bytes = Nf * CL * itemsize                        # one batch element

    # ------------------------ Fused single-pass path ------------------------
    if (not force_two_pass) and slab_bytes <= fused_budget:
        # Enough grid slices to feed both v7x TensorCores and keep the DMA
        # pipeline busy, while packing several batch rows per step when cheap.
        min_slices = 4 if B >= 4 else (2 if B >= 2 else 1)
        bt_cap = min(max(1, fused_budget // slab_bytes), max(1, B // min_slices))
        b_tile = _largest_divisor_leq(B, bt_cap)

        kernel = functools.partial(_se_fused_kernel, n_total=N,
                                   lane_fold=lane_fold, res=res)
        out_f = pl.pallas_call(
            kernel,
            out_shape=jax.ShapeDtypeStruct((B, Nf, CL), points.dtype),
            grid_spec=pltpu.PrefetchScalarGridSpec(
                num_scalar_prefetch=0,
                grid=(B // b_tile,),
                in_specs=[pl.BlockSpec((b_tile, Nf, CL), lambda bi: (bi, 0, 0))]
                         + weight_specs,
                out_specs=pl.BlockSpec((b_tile, Nf, CL), lambda bi: (bi, 0, 0)),
            ),
            compiler_params=_cp(("parallel",)),
        )(pts_f, w_reduce, b_reduce, w_expand, b_expand)
        return xyz, out_f.reshape(B, N, C)

    # ---------------------------- Two-pass path -----------------------------
    # b_tile: keep >= 2 parallel B slices (v7x dual-TC) and modest FC batching.
    bt_cap = min(8, max(1, B // 2)) if B >= 2 else 1
    b_tile = _largest_divisor_leq(B, bt_cap)
    row_bytes = CL * itemsize

    def n_tiling(budget_bytes):
        rows = max(8, budget_bytes // max(1, b_tile * row_bytes))
        if Nf <= rows:
            return Nf, 1, False                            # single full-N block
        n_tile = max(8, (min(rows, Nf) // 8) * 8)          # 8-aligned (sublane rule)
        return n_tile, pl.cdiv(Nf, n_tile), (Nf % n_tile != 0)

    n_tile_r, grid_nr, mask_r = n_tiling(reduce_budget)    # bigger blocks for reduce
    n_tile_a, grid_na, _ = n_tiling(apply_budget)          # apply tail writes are masked by Pallas

    # ---- Pass 1: gate = sigmoid(expand(swish(reduce(mean_N(points))))) -----
    reduce_kernel = functools.partial(
        _se_reduce_kernel, n_total=N, lane_fold=lane_fold,
        nf_valid=Nf, n_tile=n_tile_r, needs_mask=mask_r)
    gate = pl.pallas_call(
        reduce_kernel,
        # Lane-tiled, pre-cast gate: [B, 1, CL] in the points dtype.
        out_shape=jax.ShapeDtypeStruct((B, 1, CL), points.dtype),
        grid_spec=pltpu.PrefetchScalarGridSpec(
            num_scalar_prefetch=0,
            grid=(B // b_tile, grid_nr),
            in_specs=[pl.BlockSpec((b_tile, n_tile_r, CL), lambda bi, nj: (bi, nj, 0))]
                     + weight_specs,
            out_specs=pl.BlockSpec((b_tile, 1, CL), lambda bi, nj: (bi, 0, 0)),
            scratch_shapes=[pltpu.VMEM((b_tile, CL), jnp.float32)],
        ),
        compiler_params=_cp(("parallel", "arbitrary")),
    )(pts_f, w_reduce, b_reduce, w_expand, b_expand)

    # ---- Pass 2: out = gate * points (+ points if res) ----------------------
    apply_kernel = functools.partial(_se_apply_kernel, res=res)
    out_f = pl.pallas_call(
        apply_kernel,
        out_shape=jax.ShapeDtypeStruct((B, Nf, CL), points.dtype),
        grid_spec=pltpu.PrefetchScalarGridSpec(
            num_scalar_prefetch=0,
            grid=(B // b_tile, grid_na),
            in_specs=[
                pl.BlockSpec((b_tile, n_tile_a, CL), lambda bi, nj: (bi, nj, 0)),
                pl.BlockSpec((b_tile, 1, CL), lambda bi, nj: (bi, 0, 0)),
            ],
            out_specs=pl.BlockSpec((b_tile, n_tile_a, CL),
                                   lambda bi, nj: (bi, nj, 0)),
        ),
        compiler_params=_cp(("parallel", "parallel")),
    )(pts_f, gate)

    return xyz, out_f.reshape(B, N, C)


# ---------------------------------------------------------------------------
# Pure-JAX reference mirroring the PyTorch-style forward.
# ---------------------------------------------------------------------------
def _reference(xyz, points, w_reduce, b_reduce, w_expand, b_expand, *, res=False):
    p = jnp.transpose(points, (0, 2, 1))                   # [B, C, N]
    sq = jnp.mean(p, axis=-1)                              # [B, C]
    h = sq @ w_reduce + b_reduce[0]                        # [B, mid]
    h = h * jax.nn.sigmoid(h)
    s = h @ w_expand + b_expand[0]                         # [B, C]
    pn = jax.nn.sigmoid(s)[:, :, None] * p
    if res:
        pn = pn + p
    return xyz, jnp.transpose(pn, (0, 2, 1))               # [B, N, C]


if __name__ == "__main__":
    # Small config: in_channel = out_channel = 32, se_ratio = 1/4 -> mid = 8
    B, N, C = 2, 16, 32
    mid = max(1, int(C * 0.25))

    key = jax.random.PRNGKey(0)
    k_xyz, k_pts, k_wr, k_br, k_we, k_be, k_pts2 = jax.random.split(key, 7)

    xyz = jax.random.normal(k_xyz, (B, N, 3), dtype=jnp.float32)
    points = jax.random.normal(k_pts, (B, N, C), dtype=jnp.float32)
    # Linear weights stored pre-transposed: (in, out).
    w_reduce = jax.random.normal(k_wr, (C, mid), dtype=jnp.float32) * 0.1
    b_reduce = jax.random.normal(k_br, (1, mid), dtype=jnp.float32) * 0.1
    w_expand = jax.random.normal(k_we, (mid, C), dtype=jnp.float32) * 0.1
    b_expand = jax.random.normal(k_be, (1, C), dtype=jnp.float32) * 0.1

    # 1) Fused single-pass path (small slab fits VMEM budget).
    _, out_fused = senet_forward(xyz, points, w_reduce, b_reduce, w_expand,
                                 b_expand, res=False)
    jax.block_until_ready(out_fused)
    _, ref = _reference(xyz, points, w_reduce, b_reduce, w_expand, b_expand,
                        res=False)
    assert out_fused.shape == (B, N, C)
    assert jnp.allclose(out_fused, ref, atol=1e-5, rtol=1e-5)

    # 2) Two-pass fallback on the same inputs (forced).
    _, out_2p = senet_forward(xyz, points, w_reduce, b_reduce, w_expand,
                              b_expand, res=False, force_two_pass=True)
    jax.block_until_ready(out_2p)
    assert jnp.allclose(out_2p, ref, atol=1e-5, rtol=1e-5)

    # 3) Two-pass with a masked tail tile (Nf not divisible by the N-tile)
    #    and the residual path.  N=688, lane_fold=16 -> Nf=43; the tiny block
    #    budget forces n_tile=8 -> cdiv grid with a masked last tile.
    N3 = 688
    points3 = jax.random.normal(k_pts2, (B, N3, C), dtype=jnp.float32)
    xyz3 = jnp.zeros((B, N3, 3), dtype=jnp.float32)
    _, out_mask = senet_forward(xyz3, points3, w_reduce, b_reduce, w_expand,
                                b_expand, res=True, force_two_pass=True,
                                block_budget_bytes=8 * 512 * 4)
    jax.block_until_ready(out_mask)
    _, ref3 = _reference(xyz3, points3, w_reduce, b_reduce, w_expand, b_expand,
                         res=True)
    assert jnp.allclose(out_mask, ref3, atol=1e-5, rtol=1e-5)

    print("KERNEL_OK")
</pallas_src>

<mosaic_0001>
module attributes {stable_mosaic.version = 11 : i64} {
  func.func @_se_fused_kernel(%arg0: i32, %arg1: memref<1x1x512xf32, #tpu.memory_space<vmem>>, %arg2: memref<32x8xf32, #tpu.memory_space<vmem>>, %arg3: memref<1x8xf32, #tpu.memory_space<vmem>>, %arg4: memref<8x32xf32, #tpu.memory_space<vmem>>, %arg5: memref<1x32xf32, #tpu.memory_space<vmem>>, %arg6: memref<1x1x512xf32, #tpu.memory_space<vmem>>) attributes {dimension_semantics = [#tpu.dimension_semantics<parallel>], iteration_bounds = array<i64: 2>, scalar_prefetch = 0 : i64, scratch_operands = 0 : i64, tpu.core_type = #tpu.core_type<tc>, window_params = [{transform_indices = @transform_0, window_bounds = array<i64: 1, 1, 512>}, {pipeline_mode = #tpu.pipeline_mode<synchronous>, transform_indices = @transform_1, window_bounds = array<i64: 32, 8>}, {pipeline_mode = #tpu.pipeline_mode<synchronous>, transform_indices = @transform_2, window_bounds = array<i64: 1, 8>}, {pipeline_mode = #tpu.pipeline_mode<synchronous>, transform_indices = @transform_3, window_bounds = array<i64: 8, 32>}, {pipeline_mode = #tpu.pipeline_mode<synchronous>, transform_indices = @transform_4, window_bounds = array<i64: 1, 32>}, {transform_indices = @transform_5, window_bounds = array<i64: 1, 1, 512>}]} {
    %c0 = arith.constant 0 : index
    %c0_0 = arith.constant 0 : index
    %c0_1 = arith.constant 0 : index
    %0 = vector.load %arg1[%c0, %c0_0, %c0_1] : memref<1x1x512xf32, #tpu.memory_space<vmem>>, vector<1x1x512xf32>
    %cst = arith.constant dense<0.000000e+00> : vector<1x512xf32>
    %1 = vector.multi_reduction <add>, %0, %cst [1] : vector<1x1x512xf32> to vector<1x512xf32>
    %2 = vector.extract_strided_slice %1 {offsets = [0, 0], sizes = [1, 32], strides = [1, 1]} : vector<1x512xf32> to vector<1x32xf32>
    %3 = vector.extract_strided_slice %1 {offsets = [0, 32], sizes = [1, 32], strides = [1, 1]} : vector<1x512xf32> to vector<1x32xf32>
    %4 = arith.addf %2, %3 : vector<1x32xf32>
    %5 = vector.extract_strided_slice %1 {offsets = [0, 64], sizes = [1, 32], strides = [1, 1]} : vector<1x512xf32> to vector<1x32xf32>
    %6 = arith.addf %4, %5 : vector<1x32xf32>
    %7 = vector.extract_strided_slice %1 {offsets = [0, 96], sizes = [1, 32], strides = [1, 1]} : vector<1x512xf32> to vector<1x32xf32>
    %8 = arith.addf %6, %7 : vector<1x32xf32>
    %9 = vector.extract_strided_slice %1 {offsets = [0, 128], sizes = [1, 32], strides = [1, 1]} : vector<1x512xf32> to vector<1x32xf32>
    %10 = arith.addf %8, %9 : vector<1x32xf32>
    %11 = vector.extract_strided_slice %1 {offsets = [0, 160], sizes = [1, 32], strides = [1, 1]} : vector<1x512xf32> to vector<1x32xf32>
    %12 = arith.addf %10, %11 : vector<1x32xf32>
    %13 = vector.extract_strided_slice %1 {offsets = [0, 192], sizes = [1, 32], strides = [1, 1]} : vector<1x512xf32> to vector<1x32xf32>
    %14 = arith.addf %12, %13 : vector<1x32xf32>
    %15 = vector.extract_strided_slice %1 {offsets = [0, 224], sizes = [1, 32], strides = [1, 1]} : vector<1x512xf32> to vector<1x32xf32>
    %16 = arith.addf %14, %15 : vector<1x32xf32>
    %17 = vector.extract_strided_slice %1 {offsets = [0, 256], sizes = [1, 32], strides = [1, 1]} : vector<1x512xf32> to vector<1x32xf32>
    %18 = arith.addf %16, %17 : vector<1x32xf32>
    %19 = vector.extract_strided_slice %1 {offsets = [0, 288], sizes = [1, 32], strides = [1, 1]} : vector<1x512xf32> to vector<1x32xf32>
    %20 = arith.addf %18, %19 : vector<1x32xf32>
    %21 = vector.extract_strided_slice %1 {offsets = [0, 320], sizes = [1, 32], strides = [1, 1]} : vector<1x512xf32> to vector<1x32xf32>
    %22 = arith.addf %20, %21 : vector<1x32xf32>
    %23 = vector.extract_strided_slice %1 {offsets = [0, 352], sizes = [1, 32], strides = [1, 1]} : vector<1x512xf32> to vector<1x32xf32>
    %24 = arith.addf %22, %23 : vector<1x32xf32>
    %25 = vector.extract_strided_slice %1 {offsets = [0, 384], sizes = [1, 32], strides = [1, 1]} : vector<1x512xf32> to vector<1x32xf32>
    %26 = arith.addf %24, %25 : vector<1x32xf32>
    %27 = vector.extract_strided_slice %1 {offsets = [0, 416], sizes = [1, 32], strides = [1, 1]} : vector<1x512xf32> to vector<1x32xf32>
    %28 = arith.addf %26, %27 : vector<1x32xf32>
    %29 = vector.extract_strided_slice %1 {offsets = [0, 448], sizes = [1, 32], strides = [1, 1]} : vector<1x512xf32> to vector<1x32xf32>
    %30 = arith.addf %28, %29 : vector<1x32xf32>
    %31 = vector.extract_strided_slice %1 {offsets = [0, 480], sizes = [1, 32], strides = [1, 1]} : vector<1x512xf32> to vector<1x32xf32>
    %32 = arith.addf %30, %31 : vector<1x32xf32>
    %cst_2 = arith.constant 6.250000e-02 : f32
    %33 = vector.broadcast %cst_2 : f32 to vector<1x32xf32>
    %34 = arith.mulf %32, %33 : vector<1x32xf32>
    %c0_3 = arith.constant 0 : index
    %c0_4 = arith.constant 0 : index
    %35 = vector.load %arg2[%c0_3, %c0_4] : memref<32x8xf32, #tpu.memory_space<vmem>>, vector<32x8xf32>
    %c0_5 = arith.constant 0 : index
    %c0_6 = arith.constant 0 : index
    %36 = vector.load %arg3[%c0_5, %c0_6] : memref<1x8xf32, #tpu.memory_space<vmem>>, vector<1x8xf32>
    %c0_7 = arith.constant 0 : index
    %c0_8 = arith.constant 0 : index
    %37 = vector.load %arg4[%c0_7, %c0_8] : memref<8x32xf32, #tpu.memory_space<vmem>>, vector<8x32xf32>
    %c0_9 = arith.constant 0 : index
    %c0_10 = arith.constant 0 : index
    %38 = vector.load %arg5[%c0_9, %c0_10] : memref<1x32xf32, #tpu.memory_space<vmem>>, vector<1x32xf32>
    %cst_11 = arith.constant dense<0.000000e+00> : vector<1x8xf32>
    %39 = tpu.matmul %34, %35, %cst_11 {dimension_numbers = #tpu.dot_dimension_numbers<[1], [0], [0], [1], [0, 0, 1, 1], [], []>} : vector<1x32xf32>, vector<32x8xf32>, vector<1x8xf32> -> vector<1x8xf32>
    %40 = arith.addf %39, %36 : vector<1x8xf32>
    %41 = arith.negf %40 : vector<1x8xf32>
    %42 = math.exp %41 : vector<1x8xf32>
    %cst_12 = arith.constant 1.000000e+00 : f32
    %43 = vector.broadcast %cst_12 : f32 to vector<1x8xf32>
    %44 = arith.addf %43, %42 : vector<1x8xf32>
    %45 = arith.divf %43, %44 : vector<1x8xf32>
    %46 = arith.mulf %40, %45 : vector<1x8xf32>
    %cst_13 = arith.constant dense<0.000000e+00> : vector<1x32xf32>
    %47 = tpu.matmul %46, %37, %cst_13 {dimension_numbers = #tpu.dot_dimension_numbers<[1], [0], [0], [1], [0, 0, 1, 1], [], []>} : vector<1x8xf32>, vector<8x32xf32>, vector<1x32xf32> -> vector<1x32xf32>
    %48 = arith.addf %47, %38 : vector<1x32xf32>
    %49 = arith.negf %48 : vector<1x32xf32>
    %50 = math.exp %49 : vector<1x32xf32>
    %cst_14 = arith.constant 1.000000e+00 : f32
    %51 = vector.broadcast %cst_14 : f32 to vector<1x32xf32>
    %52 = arith.addf %51, %50 : vector<1x32xf32>
    %53 = arith.divf %51, %52 : vector<1x32xf32>
    %54 = tpu.concatenate %53, %53, %53, %53, %53, %53, %53, %53, %53, %53, %53, %53, %53, %53, %53, %53 in 1 : vector<1x32xf32>, vector<1x32xf32>, vector<1x32xf32>, vector<1x32xf32>, vector<1x32xf32>, vector<1x32xf32>, vector<1x32xf32>, vector<1x32xf32>, vector<1x32xf32>, vector<1x32xf32>, vector<1x32xf32>, vector<1x32xf32>, vector<1x32xf32>, vector<1x32xf32>, vector<1x32xf32>, vector<1x32xf32> -> vector<1x512xf32>
    %55 = vector.shape_cast %54 : vector<1x512xf32> to vector<1x1x512xf32>
    %56 = arith.mulf %0, %55 : vector<1x1x512xf32>
    %c0_15 = arith.constant 0 : index
    %c0_16 = arith.constant 0 : index
    %c0_17 = arith.constant 0 : index
    %57 = vector.load %arg6[%c0_15, %c0_16, %c0_17] : memref<1x1x512xf32, #tpu.memory_space<vmem>>, vector<1x1x512xf32>
    tpu.vector_store %arg6[%c0_15, %c0_16, %c0_17], %56 {strides = array<i32>} : memref<1x1x512xf32, #tpu.memory_space<vmem>>, vector<1x1x512xf32>,
    return
  }
  func.func @transform_0(%arg0: i32) -> (i32, i32, i32) {
    %c0_i32 = arith.constant 0 : i32
    %c0_i32_0 = arith.constant 0 : i32
    %c0_i32_1 = arith.constant 0 : i32
    return %arg0, %c0_i32, %c0_i32_0 : i32, i32, i32
  }
  func.func @transform_1(%arg0: i32) -> (i32, i32) {
    %c0_i32 = arith.constant 0 : i32
    %c0_i32_0 = arith.constant 0 : i32
    %c0_i32_1 = arith.constant 0 : i32
    return %c0_i32, %c0_i32_0 : i32, i32
  }
  func.func @transform_2(%arg0: i32) -> (i32, i32) {
    %c0_i32 = arith.constant 0 : i32
    %c0_i32_0 = arith.constant 0 : i32
    %c0_i32_1 = arith.constant 0 : i32
    return %c0_i32, %c0_i32_0 : i32, i32
  }
  func.func @transform_3(%arg0: i32) -> (i32, i32) {
    %c0_i32 = arith.constant 0 : i32
    %c0_i32_0 = arith.constant 0 : i32
    %c0_i32_1 = arith.constant 0 : i32
    return %c0_i32, %c0_i32_0 : i32, i32
  }
  func.func @transform_4(%arg0: i32) -> (i32, i32) {
    %c0_i32 = arith.constant 0 : i32
    %c0_i32_0 = arith.constant 0 : i32
    %c0_i32_1 = arith.constant 0 : i32
    return %c0_i32, %c0_i32_0 : i32, i32
  }
  func.func @transform_5(%arg0: i32) -> (i32, i32, i32) {
    %c0_i32 = arith.constant 0 : i32
    %c0_i32_0 = arith.constant 0 : i32
    %c0_i32_1 = arith.constant 0 : i32
    return %arg0, %c0_i32, %c0_i32_0 : i32, i32, i32
  }
}

</mosaic_0001>

<llo_original>
// kernel: tpu_custom_call.1
$region0: #{tpu_custom_call.1}
  #allocation0 [shape = 'u32[]', space=smem, size = 0x4, offset = 0x4, fixed_abs, tag = 'smem constant byte address 0x4 - core index']
  #allocation1 [shape = 'u32[144,128]{1,0:T(1,128)}', space=vmem, size = 0x12000, scoped, tag = 'internal scratch']
  %s0 = inlined_call_operand.vmem [shape: f32[2,1,512], index: 0, kind: input, shape index: {}]
  %s1 = inlined_call_operand.vmem [shape: f32[32,8], index: 1, kind: input, shape index: {}]
  %s2 = inlined_call_operand.vmem [shape: f32[1,8], index: 2, kind: input, shape index: {}]
  %s3 = inlined_call_operand.vmem [shape: f32[8,32], index: 3, kind: input, shape index: {}]
  %s4 = inlined_call_operand.vmem [shape: f32[1,32], index: 4, kind: input, shape index: {}]
  %s5 = inlined_call_operand.hbm [shape: f32[2,1,512], index: 5, kind: output, shape index: {}]
  %s6 = sld [smem:[#allocation0]]
  $region53: #{tpu_custom_call.1} parent=0
    _
  %s8 = ssub.s32 1, %s6
  %s9 = scalar_select 0, %s8, %s6
  $region1: #{tpu_custom_call.1} parent=0
    #allocation2 [shape = 'u8[4096]{0}', space=vmem, size = 0x1000, scoped, tag = 'output window, operand 0']
    #allocation3 [shape = 's32[2]{0}', space=sflag, size = 0x8, scoped, tag = 'scoped memory for tpu_custom_call.1']
    %10 = vsyncpa [#allocation3], 0
    %s11 = scalar_lea.sflag [#allocation3], 1
    %12 = vsyncpa %s11, 0
    loop: start=0, step=1, limit=4
    $region2: #{tpu_custom_call.1} parent=1 // loop_pre_header
      _
    $region3: #{tpu_custom_call.1} parent=1 // loop_header
      %s14 = sphi 0, %s18
      %p15 = scmp.ge.s32.totalorder %s14, 4
      %s24 = sphi 0, %s26
      %s27 = sphi 0, %s24
      %s28 = sphi 0, %s27
      %s44 = sphi 0, %s28
      %s48 = sphi 0, %s48
      %s50 = sphi 0, %s48
      %s51 = sphi 0, %s50
      %s65 = sphi 0, %s51
      %s69 = sphi 0, %s69
      %s71 = sphi 0, %s69
      %s72 = sphi 0, %s71
      %s86 = sphi 0, %s72
      %s90 = sphi 0, %s90
      %s92 = sphi 0, %s90
      %s93 = sphi 0, %s92
      %s107 = sphi 0, %s93
      %s111 = sphi 0, %s111
      %s113 = sphi 0, %s111
      %s114 = sphi 0, %s113
      %s128 = sphi 0, %s114
      %s134 = sphi 0, %s136
      %s137 = sphi 0, %s134
      %s138 = sphi 0, %s137
      %s154 = sphi 0, %s138
    $region4: #{tpu_custom_call.1} parent=1 // loop_header_branch
      %17 = sbr.rel (%p15) target = $region8
    $region5: #{tpu_custom_call.1} parent=1 // loop_body
      %s19 = ssub.s32 %s14, 1
      %s20 = ssub.s32 %s14, 2
      %s21 = sadd.s32 %s14, 1
      %s22 = ssub.s32 %s14, %s21
      %p23 = scmp.eq.s32.totalorder %s22, 0
      %s25 = sadd.s32 %s24, 1
      %s26 = scalar_select %p23, %s24, %s25
      %p29 = pneg %p23
      %p30 = scmp.eq.s32.totalorder %s14, 1
      %p31 = por %p29, %p30
      %p32 = scmp.ne.s32.totalorder %s24, %s27
      %p33 = scmp.eq.s32.totalorder %s14, 0
      %p34 = por %p32, %p33
      %p35 = scmp.ne.s32.totalorder %s24, %s27
      %p36 = scmp.eq.s32.totalorder %s19, 1
      %p37 = por %p35, %p36
      %p38 = scmp.ne.s32.totalorder %s27, %s28
      %p39 = scmp.eq.s32.totalorder %s19, 0
      %p40 = por %p38, %p39
      %p41 = scmp.ne.s32.totalorder %s27, %s28
      %p42 = scmp.eq.s32.totalorder %s20, 1
      %p43 = por %p41, %p42
      %p45 = scmp.ne.s32.totalorder %s28, %s44
      %p46 = scmp.eq.s32.totalorder %s20, 0
      %p47 = por %p45, %p46
      %s49 = sadd.s32 %s48, 1
      %p52 = scmp.eq.s32.totalorder %s14, 1
      %p53 = scmp.ne.s32.totalorder %s48, %s50
      %p54 = scmp.eq.s32.totalorder %s14, 0
      %p55 = por %p53, %p54
      %p56 = scmp.ne.s32.totalorder %s48, %s50
      %p57 = scmp.eq.s32.totalorder %s19, 1
      %p58 = por %p56, %p57
      %p59 = scmp.ne.s32.totalorder %s50, %s51
      %p60 = scmp.eq.s32.totalorder %s19, 0
      %p61 = por %p59, %p60
      %p62 = scmp.ne.s32.totalorder %s50, %s51
      %p63 = scmp.eq.s32.totalorder %s20, 1
      %p64 = por %p62, %p63
      %p66 = scmp.ne.s32.totalorder %s51, %s65
      %p67 = scmp.eq.s32.totalorder %s20, 0
      %p68 = por %p66, %p67
      %s70 = sadd.s32 %s69, 1
      %p73 = scmp.eq.s32.totalorder %s14, 1
      %p74 = scmp.ne.s32.totalorder %s69, %s71
      %p75 = scmp.eq.s32.totalorder %s14, 0
      %p76 = por %p74, %p75
      %p77 = scmp.ne.s32.totalorder %s69, %s71
      %p78 = scmp.eq.s32.totalorder %s19, 1
      %p79 = por %p77, %p78
      %p80 = scmp.ne.s32.totalorder %s71, %s72
      %p81 = scmp.eq.s32.totalorder %s19, 0
      %p82 = por %p80, %p81
      %p83 = scmp.ne.s32.totalorder %s71, %s72
      %p84 = scmp.eq.s32.totalorder %s20, 1
      %p85 = por %p83, %p84
      %p87 = scmp.ne.s32.totalorder %s72, %s86
      %p88 = scmp.eq.s32.totalorder %s20, 0
      %p89 = por %p87, %p88
      %s91 = sadd.s32 %s90, 1
      %p94 = scmp.eq.s32.totalorder %s14, 1
      %p95 = scmp.ne.s32.totalorder %s90, %s92
      %p96 = scmp.eq.s32.totalorder %s14, 0
      %p97 = por %p95, %p96
      %p98 = scmp.ne.s32.totalorder %s90, %s92
      %p99 = scmp.eq.s32.totalorder %s19, 1
      %p100 = por %p98, %p99
      %p101 = scmp.ne.s32.totalorder %s92, %s93
      %p102 = scmp.eq.s32.totalorder %s19, 0
      %p103 = por %p101, %p102
      %p104 = scmp.ne.s32.totalorder %s92, %s93
      %p105 = scmp.eq.s32.totalorder %s20, 1
      %p106 = por %p104, %p105
      %p108 = scmp.ne.s32.totalorder %s93, %s107
      %p109 = scmp.eq.s32.totalorder %s20, 0
      %p110 = por %p108, %p109
      %s112 = sadd.s32 %s111, 1
      %p115 = scmp.eq.s32.totalorder %s14, 1
      %p116 = scmp.ne.s32.totalorder %s111, %s113
      %p117 = scmp.eq.s32.totalorder %s14, 0
      %p118 = por %p116, %p117
      %p119 = scmp.ne.s32.totalorder %s111, %s113
      %p120 = scmp.eq.s32.totalorder %s19, 1
      %p121 = por %p119, %p120
      %p122 = scmp.ne.s32.totalorder %s113, %s114
      %p123 = scmp.eq.s32.totalorder %s19, 0
      %p124 = por %p122, %p123
      %p125 = scmp.ne.s32.totalorder %s113, %s114
      %p126 = scmp.eq.s32.totalorder %s20, 1
      %p127 = por %p125, %p126
      %p129 = scmp.ne.s32.totalorder %s114, %s128
      %p130 = scmp.eq.s32.totalorder %s20, 0
      %p131 = por %p129, %p130
      %s132 = ssub.s32 %s14, %s21
      %p133 = scmp.eq.s32.totalorder %s132, 0
      %s135 = sadd.s32 %s134, 1
      %s136 = scalar_select %p133, %s134, %s135
      %p139 = pneg %p133
      %p140 = scmp.eq.s32.totalorder %s14, 1
      %p141 = por %p139, %p140
      %p142 = scmp.ne.s32.totalorder %s134, %s137
      %p143 = scmp.eq.s32.totalorder %s14, 0
      %p144 = por %p142, %p143
      %p145 = scmp.ne.s32.totalorder %s134, %s137
      %p146 = scmp.eq.s32.totalorder %s19, 1
      %p147 = por %p145, %p146
      %p148 = scmp.ne.s32.totalorder %s137, %s138
      %p149 = scmp.eq.s32.totalorder %s19, 0
      %p150 = por %p148, %p149
      %p151 = scmp.ne.s32.totalorder %s137, %s138
      %p152 = scmp.eq.s32.totalorder %s20, 1
      %p153 = por %p151, %p152
      %p155 = scmp.ne.s32.totalorder %s138, %s154
      %p156 = scmp.eq.s32.totalorder %s20, 0
      %p157 = por %p155, %p156
      %p158 = scmp.le.s32.totalorder 1, %s14
      %p159 = scmp.lt.s32.totalorder %s14, 3
      %p160 = pnand %p158, %p159
      %p161 = pneg %p160
      // Predicated region
      $region9: #{tpu_custom_call.1} parent=5 // pred_check
        _
      $region10: #{tpu_custom_call.1} parent=5 // pred_check_branch
        %163 = sbr.rel (%p160) target = $region12
      $region11: #{tpu_custom_call.1} parent=5 // pred_region
        %s164 = ssub.s32 %s14, 1
        // Predicated region
        $region13: #{tpu_custom_call.1} parent=11 // pred_check
          %p165 = pneg %p61
        $region14: #{tpu_custom_call.1} parent=11 // pred_check_branch
          %167 = sbr.rel (%p165) target = $region16
        $region15: #{tpu_custom_call.1} parent=11 // pred_region
          _
        $region16: #{tpu_custom_call.1} parent=11 // pred_fallthru
          _
        // Predicated region
        $region17: #{tpu_custom_call.1} parent=11 // pred_check
          %p168 = pneg %p82
        $region18: #{tpu_custom_call.1} parent=11 // pred_check_branch
          %170 = sbr.rel (%p168) target = $region20
        $region19: #{tpu_custom_call.1} parent=11 // pred_region
          _
        $region20: #{tpu_custom_call.1} parent=11 // pred_fallthru
          _
        // Predicated region
        $region21: #{tpu_custom_call.1} parent=11 // pred_check
          %p171 = pneg %p103
        $region22: #{tpu_custom_call.1} parent=11 // pred_check_branch
          %173 = sbr.rel (%p171) target = $region24
        $region23: #{tpu_custom_call.1} parent=11 // pred_region
          _
        $region24: #{tpu_custom_call.1} parent=11 // pred_fallthru
          _
        // Predicated region
        $region25: #{tpu_custom_call.1} parent=11 // pred_check
          %p174 = pneg %p124
        $region26: #{tpu_custom_call.1} parent=11 // pred_check_branch
          %176 = sbr.rel (%p174) target = $region28
        $region27: #{tpu_custom_call.1} parent=11 // pred_region
          _
        $region28: #{tpu_custom_call.1} parent=11 // pred_fallthru
          _
      $region12: #{tpu_custom_call.1} parent=5 // pred_fallthru
        _
      %p177 = scmp.lt.s32.totalorder %s14, 2
      // Predicated region
      $region29: #{tpu_custom_call.1} parent=5 // pred_check
        %p178 = pneg %p177
      $region30: #{tpu_custom_call.1} parent=5 // pred_check_branch
        %180 = sbr.rel (%p178) target = $region32
      $region31: #{tpu_custom_call.1} parent=5 // pred_region
        // Predicated region
        $region33: #{tpu_custom_call.1} parent=31 // pred_check
          %p181 = pneg %p34
        $region34: #{tpu_custom_call.1} parent=31 // pred_check_branch
          %183 = sbr.rel (%p181) target = $region36
        $region35: #{tpu_custom_call.1} parent=31 // pred_region
          %p184 = scmp.lt.s32.totalorder %s14, 1
          %s185 = scalar_select %p184, %s14, 1
          %s186 = smul.addr %s185, 4
          %s187 = scalar_lea.vmem %s0, %s186
        $region36: #{tpu_custom_call.1} parent=31 // pred_fallthru
          _
      $region32: #{tpu_custom_call.1} parent=5 // pred_fallthru
        _
      %p188 = scmp.le.s32.totalorder 1, %s14
      %p189 = scmp.lt.s32.totalorder %s14, 3
      %p190 = pnand %p188, %p189
      %p191 = pneg %p190
      // Predicated region
      $region37: #{tpu_custom_call.1} parent=5 // pred_check
        _
      $region38: #{tpu_custom_call.1} parent=5 // pred_check_branch
        %193 = sbr.rel (%p190) target = $region40
      $region39: #{tpu_custom_call.1} parent=5 // pred_region
        %s194 = ssub.s32 %s14, 1
        %p195 = scmp.lt.s32.totalorder %s19, 1
        %s196 = scalar_select %p195, %s19, 1
        %s197 = smul.addr %s196, 4
        %s198 = scalar_lea.vmem %s0, %s197
        %p199 = pneg %p40
        %p200 = pneg %p37
        %p201 = pneg %p61
        %p202 = pneg %p58
        %p203 = pneg %p82
        %p204 = pneg %p79
        %p205 = pneg %p103
        %p206 = pneg %p100
        %p207 = pneg %p124
        %p208 = pneg %p121
        %p209 = pneg %p150
        %p210 = pneg %p147
        %s211 = sand.u32 %s137, 1
        %s212 = scalar_lea.sflag [#allocation3], %s211
        %s213 = sand.u32 %s137, 1
        %s214 = smul.addr %s213, 4
        %s215 = scalar_lea.vmem [#allocation2], %s214
        %p216 = scmp.lt.s32.totalorder %s19, 1
        %s217 = scalar_select %p216, %s19, 1
        %s218 = smul.addr %s217, 4
        %s219 = scalar_lea.vmem %s0, %s218
        %v220 = vld [vmem:[%s219] sm:$0xf]
        %v221 = vadd.f32 %v220, 0.0
        %223 = vrot.lane.b32.xlu0 %v221, 96
        %v224 = vpop.permute.xlu0 %223
        %v226 = vadd.f32 %v221, %v224
        %227 = vrot.lane.b32.xlu0 %v221, 64
        %v228 = vpop.permute.xlu0 %227
        %v230 = vadd.f32 %v226, %v228
        %231 = vrot.lane.b32.xlu0 %v221, 32
        %v232 = vpop.permute.xlu0 %231
        %v234 = vadd.f32 %v230, %v232
        %v235 = vrot.slane %v221, 1
        %v237 = vadd.f32 %v234, %v235
        %v238 = vrot.slane %v224, 1
        %v240 = vadd.f32 %v237, %v238
        %v241 = vrot.slane %v228, 1
        %v243 = vadd.f32 %v240, %v241
        %v244 = vrot.slane %v232, 1
        %v246 = vadd.f32 %v243, %v244
        %v247 = vrot.slane %v221, 2
        %v249 = vadd.f32 %v246, %v247
        %v250 = vrot.slane %v224, 2
        %v252 = vadd.f32 %v249, %v250
        %v253 = vrot.slane %v228, 2
        %v255 = vadd.f32 %v252, %v253
        %v256 = vrot.slane %v232, 2
        %v258 = vadd.f32 %v255, %v256
        %v259 = vrot.slane %v221, 3
        %v261 = vadd.f32 %v258, %v259
        %v262 = vrot.slane %v224, 3
        %v264 = vadd.f32 %v261, %v262
        %v265 = vrot.slane %v228, 3
        %v267 = vadd.f32 %v264, %v265
        %v268 = vrot.slane %v232, 3
        %v270 = vadd.f32 %v267, %v268
        %v271 = vmul.f32 %v270, 0.0625
        %v272 = vld [vmem:[%s1] sm:$0xff]
        %v273 = vld [vmem:[%s1 + $0x8] sm:$0xff]
        %v274 = vld [vmem:[%s1 + $0x10] sm:$0xff]
        %v275 = vld [vmem:[%s1 + $0x18] sm:$0xff]
        %v276 = vld [vmem:[%s2] sm:$0x1]
        %v277 = vld [vmem:[%s3] sm:$0xff]
        %v278 = vld [vmem:[%s4] sm:$0x1]
        %vm279 = vcmask 261120
        %v281 = vsel %vm279, %v271, 0
        %283 = vmatprep.subr.mxu0 0.0
        %284 = vmatpush1.msra.mxu0 %v272
        %285 = vmatprep.subr.mxu0 0.0
        %286 = vmatpush1.msra.mxu0 %v273
        %287 = vmatprep.subr.mxu0 0.0
        %288 = vmatpush1.msra.mxu0 %v274
        %289 = vmatprep.subr.mxu0 0.0
        %290 = vmatpush1.msra.mxu0 %v275
        %291 = vmatprep.subr.mxu0 0.0
        %292 = vmatpush1.msra.mxu0 0.0
        %293 = vmatprep.subr.mxu0 0.0
        %294 = vmatpush1.msra.mxu0 0.0
        %295 = vmatprep.subr.mxu0 0.0
        %296 = vmatpush1.msra.mxu0 0.0
        %297 = vmatprep.subr.mxu0 0.0
        %298 = vmatpush1.msra.mxu0 0.0
        %299 = vmatprep.subr.mxu0 0.0
        %300 = vmatpush1.msra.mxu0 0.0
        %301 = vmatprep.subr.mxu0 0.0
        %302 = vmatpush1.msra.mxu0 0.0
        %303 = vmatprep.subr.mxu0 0.0
        %304 = vmatpush1.msra.mxu0 0.0
        %305 = vmatprep.subr.mxu0 0.0
        %306 = vmatpush1.msra.mxu0 0.0
        %307 = vmatprep.subr.mxu0 0.0
        %308 = vmatpush1.msra.mxu0 0.0
        %309 = vmatprep.subr.mxu0 0.0
        %310 = vmatpush1.msra.mxu0 0.0
        %311 = vmatprep.subr.mxu0 0.0
        %312 = vmatpush1.msra.mxu0 0.0
        %313 = vmatprep.subr.mxu0 0.0
        %314 = vmatpush1.msra.mxu0 0.0
        %315 = vmatprep.subr.mxu0 0.0
        %316 = vmatpush1.msra.mxu0 0.0
        %317 = vmatprep.subr.mxu0 0.0
        %318 = vmatpush1.msra.mxu0 0.0
        %319 = vmatprep.subr.mxu0 0.0
        %320 = vmatpush1.msra.mxu0 0.0
        %321 = vmatprep.subr.mxu0 0.0
        %322 = vmatpush1.msra.mxu0 0.0
        %323 = vmatprep.subr.mxu0 0.0
        %324 = vmatpush1.msra.mxu0 0.0
        %325 = vmatprep.subr.mxu0 0.0
        %326 = vmatpush1.msra.mxu0 0.0
        %327 = vmatprep.subr.mxu0 0.0
        %328 = vmatpush1.msra.mxu0 0.0
        %329 = vmatprep.subr.mxu0 0.0
        %330 = vmatpush1.msra.mxu0 0.0
        %331 = vmatprep.subr.mxu0 0.0
        %332 = vmatpush1.msra.mxu0 0.0
        %333 = vmatprep.subr.mxu0 0.0
        %334 = vmatpush1.msra.mxu0 0.0
        %335 = vmatprep.subr.mxu0 0.0
        %336 = vmatpush1.msra.mxu0 0.0
        %337 = vmatprep.subr.mxu0 0.0
        %338 = vmatpush1.msra.mxu0 0.0
        %339 = vmatprep.subr.mxu0 0.0
        %340 = vmatpush1.msra.mxu0 0.0
        %341 = vmatprep.subr.mxu0 0.0
        %342 = vmatpush1.msra.mxu0 0.0
        %343 = vmatprep.subr.mxu0 0.0
        %344 = vmatpush1.msra.mxu0 0.0
        %345 = vmatprep.subr.mxu0 0.0
        %346 = vmatpush1.msra.mxu0 0.0
        %347 = vmatprep.mubr.f32.mxu0 0.0
        %348 = vmatmul.mubr.f32.gmra.mrb[0].mxu0 %v281
        %v349 = vpop.f32.mrb[0].mxu0
        %v350 = vadd.f32 %v276, %v349
        %v351 = vpop.f32.mrb[0].mxu0
        %352 = vdwg.mxu0
        %v353 = vxor.u32 %v350, 2147483648
        %v354 = vmul.f32 %v353, 1.442695
        %v355 = vpow.pop %v354
        %v356 = vadd.f32 %v355, 1.0
        %v357 = vrcp.pop %v356
        %v358 = vmul.f32 1.0, %v357
        %v359 = vmul.f32 %v350, %v358
        %vm360 = vcmask 64512
        %v362 = vsel %vm360, %v359, 0
        %364 = vmatprep.subr.mxu0 0.0
        %365 = vmatpush1.msra.mxu0 %v277
        %366 = vmatprep.subr.mxu0 0.0
        %367 = vmatpush1.msra.mxu0 0.0
        %368 = vmatprep.subr.mxu0 0.0
        %369 = vmatpush1.msra.mxu0 0.0
        %370 = vmatprep.subr.mxu0 0.0
        %371 = vmatpush1.msra.mxu0 0.0
        %372 = vmatprep.subr.mxu0 0.0
        %373 = vmatpush1.msra.mxu0 0.0
        %374 = vmatprep.subr.mxu0 0.0
        %375 = vmatpush1.msra.mxu0 0.0
        %376 = vmatprep.subr.mxu0 0.0
        %377 = vmatpush1.msra.mxu0 0.0
        %378 = vmatprep.subr.mxu0 0.0
        %379 = vmatpush1.msra.mxu0 0.0
        %380 = vmatprep.subr.mxu0 0.0
        %381 = vmatpush1.msra.mxu0 0.0
        %382 = vmatprep.subr.mxu0 0.0
        %383 = vmatpush1.msra.mxu0 0.0
        %384 = vmatprep.subr.mxu0 0.0
        %385 = vmatpush1.msra.mxu0 0.0
        %386 = vmatprep.subr.mxu0 0.0
        %387 = vmatpush1.msra.mxu0 0.0
        %388 = vmatprep.subr.mxu0 0.0
        %389 = vmatpush1.msra.mxu0 0.0
        %390 = vmatprep.subr.mxu0 0.0
        %391 = vmatpush1.msra.mxu0 0.0
        %392 = vmatprep.subr.mxu0 0.0
        %393 = vmatpush1.msra.mxu0 0.0
        %394 = vmatprep.subr.mxu0 0.0
        %395 = vmatpush1.msra.mxu0 0.0
        %396 = vmatprep.subr.mxu0 0.0
        %397 = vmatpush1.msra.mxu0 0.0
        %398 = vmatprep.subr.mxu0 0.0
        %399 = vmatpush1.msra.mxu0 0.0
        %400 = vmatprep.subr.mxu0 0.0
        %401 = vmatpush1.msra.mxu0 0.0
        %402 = vmatprep.subr.mxu0 0.0
        %403 = vmatpush1.msra.mxu0 0.0
        %404 = vmatprep.subr.mxu0 0.0
        %405 = vmatpush1.msra.mxu0 0.0
        %406 = vmatprep.subr.mxu0 0.0
        %407 = vmatpush1.msra.mxu0 0.0
        %408 = vmatprep.subr.mxu0 0.0
        %409 = vmatpush1.msra.mxu0 0.0
        %410 = vmatprep.subr.mxu0 0.0
        %411 = vmatpush1.msra.mxu0 0.0
        %412 = vmatprep.subr.mxu0 0.0
        %413 = vmatpush1.msra.mxu0 0.0
        %414 = vmatprep.subr.mxu0 0.0
        %415 = vmatpush1.msra.mxu0 0.0
        %416 = vmatprep.subr.mxu0 0.0
        %417 = vmatpush1.msra.mxu0 0.0
        %418 = vmatprep.subr.mxu0 0.0
        %419 = vmatpush1.msra.mxu0 0.0
        %420 = vmatprep.subr.mxu0 0.0
        %421 = vmatpush1.msra.mxu0 0.0
        %422 = vmatprep.subr.mxu0 0.0
        %423 = vmatpush1.msra.mxu0 0.0
        %424 = vmatprep.subr.mxu0 0.0
        %425 = vmatpush1.msra.mxu0 0.0
        %426 = vmatprep.subr.mxu0 0.0
        %427 = vmatpush1.msra.mxu0 0.0
        %428 = vmatprep.mubr.f32.mxu0 0.0
        %429 = vmatmul.mubr.f32.gmra.mrb[0].mxu0 %v362
        %v430 = vpop.f32.mrb[0].mxu0
        %v431 = vadd.f32 %v278, %v430
        %v432 = vpop.f32.mrb[0].mxu0
        %433 = vdwg.mxu0
        %v434 = vxor.u32 %v431, 2147483648
        %v435 = vmul.f32 %v434, 1.442695
        %v436 = vpow.pop %v435
        %v437 = vadd.f32 %v436, 1.0
        %v438 = vrcp.pop %v437
        %v439 = vmul.f32 1.0, %v438
        %441 = vrot.lane.b32.xlu0 %v439, 32
        %v442 = vpop.permute.xlu0 %441
        %444 = vrot.lane.b32.xlu0 %v439, 64
        %v445 = vpop.permute.xlu0 %444
        %447 = vrot.lane.b32.xlu0 %v439, 96
        %v448 = vpop.permute.xlu0 %447
        %v450 = vsel %vm279, %v439, %v442
        %vm451 = vcmask 523264
        %v452 = vsel %vm451, %v450, %v445
        %vm453 = vcmask 785408
        %v454 = vsel %vm453, %v452, %v448
        %v456 = vcombine.low %v454, %v454
        %v458 = vunpack.c.l.s4 1966171168
        %v459 = vunpack.c.0.s8 %v458
        %v460 = vlaneseq
        %v461 = vshrl.u32 %v460, 7
        %v462 = vsub.s32 %v459, %v461
        %v463 = vrot.slane %v456, %v462
        %v464 = vcombine.low %v463, %v463
        %v466 = vunpack.c.l.s4 1966171168
        %v467 = vunpack.c.0.s8 %v466
        %v468 = vlaneseq
        %v469 = vshrl.u32 %v468, 7
        %v470 = vsub.s32 %v467, %v469
        %v471 = vrot.slane %v464, %v470
        %v473 = vmul.f32 %v220, %v471
        %v474 = vlaneseq
        %vm475 = vcmp.ge.s32.totalorder %v474, 0
        %vm476 = vcmp.lt.s32.totalorder %v474, 512
        %vm477 = vmand %vm475, %vm476
        %478 = vst.msk [vmem:[%s215] sm:$0xf] %vm477, %v473
        %s479 = sand.u32 %s137, 1
        %s480 = scalar_lea.sflag [#allocation3], %s479
        %s481 = sand.u32 %s137, 1
        %s482 = smul.addr %s481, 4
        %s483 = scalar_lea.vmem [#allocation2], %s482
        // Predicated region
        $region41: #{tpu_custom_call.1} parent=39 // pred_check
          %p484 = pneg %p147
        $region42: #{tpu_custom_call.1} parent=39 // pred_check_branch
          %486 = sbr.rel (%p484) target = $region44
        $region43: #{tpu_custom_call.1} parent=39 // pred_region
          %s488 = ssub.s32 64, 64
          %489 = vsyncadd %s480, %s488
          %s490 = smul.addr %s19, 4
          %s491 = smul.addr %s490, 16
          %s492 = scalar_lea.hbm %s5, %s491
          %s494 = sshll.u32 %s483, 4
          %s495 = int_to_ptr.vmem [resolvable:$true] %s494
          %497 = dma.vmem_to_hbm [thread:$0]  %s495, 64, %s492, %s480
        $region44: #{tpu_custom_call.1} parent=39 // pred_fallthru
          _
      $region40: #{tpu_custom_call.1} parent=5 // pred_fallthru
        _
      %p498 = scmp.le.s32.totalorder 2, %s14
      // Predicated region
      $region45: #{tpu_custom_call.1} parent=5 // pred_check
        %p499 = pneg %p498
      $region46: #{tpu_custom_call.1} parent=5 // pred_check_branch
        %501 = sbr.rel (%p499) target = $region48
      $region47: #{tpu_custom_call.1} parent=5 // pred_region
        %s502 = ssub.s32 %s14, 2
        // Predicated region
        $region49: #{tpu_custom_call.1} parent=47 // pred_check
          %p503 = pneg %p153
        $region50: #{tpu_custom_call.1} parent=47 // pred_check_branch
          %505 = sbr.rel (%p503) target = $region52
        $region51: #{tpu_custom_call.1} parent=47 // pred_region
          %s506 = sand.u32 %s138, 1
          %s507 = scalar_lea.sflag [#allocation3], %s506
          %s508 = sand.u32 %s138, 1
          %s509 = smul.addr %s508, 4
          %s510 = scalar_lea.vmem [#allocation2], %s509
          %511 = dma.done %s507, 64
        $region52: #{tpu_custom_call.1} parent=47 // pred_fallthru
          _
      $region48: #{tpu_custom_call.1} parent=5 // pred_fallthru
        _
    $region6: #{tpu_custom_call.1} parent=1 // loop_footer
      %s18 = sadd.s32 1, %s14
    $region7: #{tpu_custom_call.1} parent=1 // loop_footer_branch
      %13 = sbr.rel target = $region3
    $region8: #{tpu_custom_call.1} parent=1 // loop_exit
      _
    %512 = vsyncpa [#allocation3], 1
    %s513 = scalar_lea.sflag [#allocation3], 1
    %514 = vsyncpa %s513, 1

</llo_original>
